<compile_context>
chip_gen: v7x
topology: tpu7x:2x2x1
jax: 0.10.0
libtpu: 0.0.40
codegen_flags: <defaults>
</compile_context>

<pallas_src>
import jax
import jax.numpy as jnp
from jax import lax
from jax.experimental import pallas as pl
from jax.experimental.pallas import tpu as pltpu

BN = 512  # output rows gathered per grid step


def _gather_kernel(t_ref, table_ref, out_ref):
    # t_ref:     (BN, 1)  int32 indices for this block (VMEM)
    # table_ref: (T1, D)  embedding table, full array resident in VMEM (constant block)
    # out_ref:   (BN, D)  gathered output block
    idx = t_ref[...]                      # (BN, 1) int32
    tbl = table_ref[...]                  # (T1, D)
    bn = idx.shape[0]
    t1 = tbl.shape[0]
    # one_hot[b, r] = (idx[b] == r); rows with invalid idx become all-zero.
    iota = lax.broadcasted_iota(jnp.int32, (bn, t1), 1)
    one_hot = (idx == iota).astype(tbl.dtype)          # (BN, T1)
    out_ref[...] = jnp.dot(
        one_hot, tbl, preferred_element_type=jnp.float32
    ).astype(out_ref.dtype)


def positional_encoding_lookup(t, table):
    """Gather rows of `table` at integer indices `t` (any shape) via a Pallas kernel."""
    t = jnp.asarray(t)
    orig_shape = t.shape
    T1, D = table.shape

    t_flat = t.reshape(-1).astype(jnp.int32)
    n = t_flat.shape[0]
    n_blocks = pl.cdiv(n, BN)
    n_pad = n_blocks * BN
    if n_pad != n:
        # Tiny O(n) int pad (4 B/index vs 4*D B/output row); padded rows are sliced off below.
        t_flat = jnp.pad(t_flat, (0, n_pad - n))
    t_col = t_flat.reshape(n_pad, 1)  # column layout -> indices land on sublanes

    # Raise the scoped-VMEM limit only when the resident table actually needs it.
    itemsize = jnp.dtype(table.dtype).itemsize
    table_bytes = T1 * D * itemsize
    out_block_bytes = BN * D * itemsize
    idx_block_bytes = BN * 128 * 4          # (BN, 1) int32 block, lane-padded layout
    need = 2 * (table_bytes + out_block_bytes + idx_block_bytes) + (2 << 20)
    vmem_limit = None if need <= (16 << 20) else int(min(need, 100 << 20))

    out = pl.pallas_call(
        _gather_kernel,
        out_shape=jax.ShapeDtypeStruct((n_pad, D), table.dtype),
        grid_spec=pltpu.PrefetchScalarGridSpec(
            num_scalar_prefetch=0,
            grid=(n_blocks,),
            in_specs=[
                pl.BlockSpec((BN, 1), lambda i: (i, 0)),     # index block
                pl.BlockSpec((T1, D), lambda i: (0, 0)),     # full table, constant block
            ],
            out_specs=pl.BlockSpec((BN, D), lambda i: (i, 0)),
        ),
        compiler_params=pltpu.CompilerParams(
            dimension_semantics=("parallel",),
            vmem_limit_bytes=vmem_limit,
        ),
    )(t_col, table)

    out = out[:n]
    return out.reshape(*orig_shape, D)


class PositionalEncoding:
    """JAX/Pallas port of the PyTorch PositionalEncoding module."""

    def __init__(self, embed_dim: int, num_timesteps: int = 0, shared: bool = True,
                 key=jax.random.PRNGKey(0)):
        self.num_timesteps = num_timesteps
        self.shared = shared
        self.concatenate = False
        shape = (num_timesteps + 1, embed_dim)
        if shared:
            self.pos_embedding = 0.02 * jax.random.normal(key, shape, jnp.float32)
        else:
            k1, k2 = jax.random.split(key)
            self.pos_embedding_context = 0.02 * jax.random.normal(k1, shape, jnp.float32)
            self.pos_embedding_target = 0.02 * jax.random.normal(k2, shape, jnp.float32)

    def __call__(self, t, is_context: bool = True):
        if self.shared:
            return positional_encoding_lookup(t, self.pos_embedding)
        if is_context:
            return positional_encoding_lookup(t, self.pos_embedding_context)
        return positional_encoding_lookup(t, self.pos_embedding_target)


if __name__ == "__main__":
    key = jax.random.PRNGKey(0)
    k_param, k_idx = jax.random.split(key)

    embed_dim = 32
    num_timesteps = 10

    # shared=True module
    mod = PositionalEncoding(embed_dim, num_timesteps=num_timesteps, shared=True, key=k_param)

    # index tensor t of shape (batch=2, seq=8), values in [0, num_timesteps]
    t = jax.random.randint(k_idx, (2, 8), 0, num_timesteps + 1, dtype=jnp.int32)

    out = mod(t)
    out = jax.block_until_ready(out)

    # reference: plain JAX gather
    ref = mod.pos_embedding[t]
    assert out.shape == (2, 8, embed_dim), out.shape
    assert out.dtype == jnp.float32
    assert jnp.allclose(out, ref), "mismatch vs reference gather"

    # non-shared variant (context / target tables)
    mod2 = PositionalEncoding(embed_dim, num_timesteps=num_timesteps, shared=False, key=k_param)
    out_ctx = jax.block_until_ready(mod2(t, is_context=True))
    out_tgt = jax.block_until_ready(mod2(t, is_context=False))
    assert jnp.allclose(out_ctx, mod2.pos_embedding_context[t])
    assert jnp.allclose(out_tgt, mod2.pos_embedding_target[t])

    print("KERNEL_OK")
</pallas_src>

<mosaic_0001>
module attributes {stable_mosaic.version = 11 : i64} {
  func.func @_gather_kernel(%arg0: i32, %arg1: memref<512x1xi32, #tpu.memory_space<vmem>>, %arg2: memref<11x32xf32, #tpu.memory_space<vmem>>, %arg3: memref<512x32xf32, #tpu.memory_space<vmem>>) attributes {dimension_semantics = [#tpu.dimension_semantics<parallel>], iteration_bounds = array<i64: 1>, scalar_prefetch = 0 : i64, scratch_operands = 0 : i64, tpu.core_type = #tpu.core_type<tc>, window_params = [{transform_indices = @transform_0, window_bounds = array<i64: 512, 1>}, {pipeline_mode = #tpu.pipeline_mode<synchronous>, transform_indices = @transform_1, window_bounds = array<i64: 11, 32>}, {transform_indices = @transform_2, window_bounds = array<i64: 512, 32>}]} {
    %c0 = arith.constant 0 : index
    %c0_0 = arith.constant 0 : index
    %0 = vector.load %arg1[%c0, %c0_0] : memref<512x1xi32, #tpu.memory_space<vmem>>, vector<512x1xi32>
    %c0_1 = arith.constant 0 : index
    %c0_2 = arith.constant 0 : index
    %1 = vector.load %arg2[%c0_1, %c0_2] : memref<11x32xf32, #tpu.memory_space<vmem>>, vector<11x32xf32>
    %2 = tpu.iota {dimensions = array<i32: 1>} : vector<512x11xi32>
    %3 = vector.broadcast %0 : vector<512x1xi32> to vector<512x11xi32>
    %4 = arith.cmpi eq, %3, %2 : vector<512x11xi32>
    %5 = arith.extui %4 : vector<512x11xi1> to vector<512x11xi32>
    %6 = arith.sitofp %5 : vector<512x11xi32> to vector<512x11xf32>
    %cst = arith.constant dense<0.000000e+00> : vector<512x32xf32>
    %7 = tpu.matmul %6, %1, %cst {dimension_numbers = #tpu.dot_dimension_numbers<[1], [0], [0], [1], [0, 0, 1, 1], [], []>} : vector<512x11xf32>, vector<11x32xf32>, vector<512x32xf32> -> vector<512x32xf32>
    %c0_3 = arith.constant 0 : index
    %c0_4 = arith.constant 0 : index
    %8 = vector.load %arg3[%c0_3, %c0_4] : memref<512x32xf32, #tpu.memory_space<vmem>>, vector<512x32xf32>
    tpu.vector_store %arg3[%c0_3, %c0_4], %7 {strides = array<i32>} : memref<512x32xf32, #tpu.memory_space<vmem>>, vector<512x32xf32>,
    return
  }
  func.func @transform_0(%arg0: i32) -> (i32, i32) {
    %c0_i32 = arith.constant 0 : i32
    %c0_i32_0 = arith.constant 0 : i32
    return %arg0, %c0_i32 : i32, i32
  }
  func.func @transform_1(%arg0: i32) -> (i32, i32) {
    %c0_i32 = arith.constant 0 : i32
    %c0_i32_0 = arith.constant 0 : i32
    %c0_i32_1 = arith.constant 0 : i32
    return %c0_i32, %c0_i32_0 : i32, i32
  }
  func.func @transform_2(%arg0: i32) -> (i32, i32) {
    %c0_i32 = arith.constant 0 : i32
    %c0_i32_0 = arith.constant 0 : i32
    return %arg0, %c0_i32 : i32, i32
  }
}

</mosaic_0001>

<llo_original>
// kernel: tpu_custom_call.1
$region0: #{tpu_custom_call.1}
  #allocation0 [shape = 'u32[]', space=smem, size = 0x4, offset = 0x4, fixed_abs, tag = 'smem constant byte address 0x4 - core index']
  #allocation1 [shape = 'u32[144,128]{1,0:T(1,128)}', space=vmem, size = 0x12000, scoped, tag = 'internal scratch']
  %s0 = inlined_call_operand.vmem [shape: s32[512,1], index: 0, kind: input, shape index: {}]
  %s1 = inlined_call_operand.vmem [shape: f32[11,32], index: 1, kind: input, shape index: {}]
  %s2 = inlined_call_operand.vmem [shape: f32[512,32], index: 2, kind: output, shape index: {}]
  %s3 = sld [smem:[#allocation0]]
  $region18: #{tpu_custom_call.1} parent=0
    _
  %s5 = ssub.s32 1, %s3
  %s6 = scalar_select 0, %s5, %s3
  // Predicated region
  $region2: #{tpu_custom_call.1} parent=0 // pred_check
    _
  $region3: #{tpu_custom_call.1} parent=0 // pred_check_branch
    %8 = sbr.rel (0) target = $region5
  $region4: #{tpu_custom_call.1} parent=0 // pred_region
    _
  $region5: #{tpu_custom_call.1} parent=0 // pred_fallthru
    _
  // Predicated region
  $region6: #{tpu_custom_call.1} parent=0 // pred_check
    _
  $region7: #{tpu_custom_call.1} parent=0 // pred_check_branch
    %10 = sbr.rel (0) target = $region9
  $region8: #{tpu_custom_call.1} parent=0 // pred_region
    _
  $region9: #{tpu_custom_call.1} parent=0 // pred_fallthru
    _
  %v11 = vld [vmem:[%s0] sm:$0xff]
  %v12 = vld [vmem:[%s0 + $0x8] sm:$0xff]
  %v13 = vld [vmem:[%s0 + $0x10] sm:$0xff]
  %v14 = vld [vmem:[%s0 + $0x18] sm:$0xff]
  %v15 = vld [vmem:[%s0 + $0x20] sm:$0xff]
  %v16 = vld [vmem:[%s0 + $0x28] sm:$0xff]
  %v17 = vld [vmem:[%s0 + $0x30] sm:$0xff]
  %v18 = vld [vmem:[%s0 + $0x38] sm:$0xff]
  %v19 = vld [vmem:[%s0 + $0x40] sm:$0xff]
  %v20 = vld [vmem:[%s0 + $0x48] sm:$0xff]
  %v21 = vld [vmem:[%s0 + $0x50] sm:$0xff]
  %v22 = vld [vmem:[%s0 + $0x58] sm:$0xff]
  %v23 = vld [vmem:[%s0 + $0x60] sm:$0xff]
  %v24 = vld [vmem:[%s0 + $0x68] sm:$0xff]
  %v25 = vld [vmem:[%s0 + $0x70] sm:$0xff]
  %v26 = vld [vmem:[%s0 + $0x78] sm:$0xff]
  %v27 = vld [vmem:[%s0 + $0x80] sm:$0xff]
  %v28 = vld [vmem:[%s0 + $0x88] sm:$0xff]
  %v29 = vld [vmem:[%s0 + $0x90] sm:$0xff]
  %v30 = vld [vmem:[%s0 + $0x98] sm:$0xff]
  %v31 = vld [vmem:[%s0 + $0xa0] sm:$0xff]
  %v32 = vld [vmem:[%s0 + $0xa8] sm:$0xff]
  %v33 = vld [vmem:[%s0 + $0xb0] sm:$0xff]
  %v34 = vld [vmem:[%s0 + $0xb8] sm:$0xff]
  %v35 = vld [vmem:[%s0 + $0xc0] sm:$0xff]
  %v36 = vld [vmem:[%s0 + $0xc8] sm:$0xff]
  %v37 = vld [vmem:[%s0 + $0xd0] sm:$0xff]
  %v38 = vld [vmem:[%s0 + $0xd8] sm:$0xff]
  %v39 = vld [vmem:[%s0 + $0xe0] sm:$0xff]
  %v40 = vld [vmem:[%s0 + $0xe8] sm:$0xff]
  %v41 = vld [vmem:[%s0 + $0xf0] sm:$0xff]
  %v42 = vld [vmem:[%s0 + $0xf8] sm:$0xff]
  %v43 = vld [vmem:[%s0 + $0x100] sm:$0xff]
  %v44 = vld [vmem:[%s0 + $0x108] sm:$0xff]
  %v45 = vld [vmem:[%s0 + $0x110] sm:$0xff]
  %v46 = vld [vmem:[%s0 + $0x118] sm:$0xff]
  %v47 = vld [vmem:[%s0 + $0x120] sm:$0xff]
  %v48 = vld [vmem:[%s0 + $0x128] sm:$0xff]
  %v49 = vld [vmem:[%s0 + $0x130] sm:$0xff]
  %v50 = vld [vmem:[%s0 + $0x138] sm:$0xff]
  %v51 = vld [vmem:[%s0 + $0x140] sm:$0xff]
  %v52 = vld [vmem:[%s0 + $0x148] sm:$0xff]
  %v53 = vld [vmem:[%s0 + $0x150] sm:$0xff]
  %v54 = vld [vmem:[%s0 + $0x158] sm:$0xff]
  %v55 = vld [vmem:[%s0 + $0x160] sm:$0xff]
  %v56 = vld [vmem:[%s0 + $0x168] sm:$0xff]
  %v57 = vld [vmem:[%s0 + $0x170] sm:$0xff]
  %v58 = vld [vmem:[%s0 + $0x178] sm:$0xff]
  %v59 = vld [vmem:[%s0 + $0x180] sm:$0xff]
  %v60 = vld [vmem:[%s0 + $0x188] sm:$0xff]
  %v61 = vld [vmem:[%s0 + $0x190] sm:$0xff]
  %v62 = vld [vmem:[%s0 + $0x198] sm:$0xff]
  %v63 = vld [vmem:[%s0 + $0x1a0] sm:$0xff]
  %v64 = vld [vmem:[%s0 + $0x1a8] sm:$0xff]
  %v65 = vld [vmem:[%s0 + $0x1b0] sm:$0xff]
  %v66 = vld [vmem:[%s0 + $0x1b8] sm:$0xff]
  %v67 = vld [vmem:[%s0 + $0x1c0] sm:$0xff]
  %v68 = vld [vmem:[%s0 + $0x1c8] sm:$0xff]
  %v69 = vld [vmem:[%s0 + $0x1d0] sm:$0xff]
  %v70 = vld [vmem:[%s0 + $0x1d8] sm:$0xff]
  %v71 = vld [vmem:[%s0 + $0x1e0] sm:$0xff]
  %v72 = vld [vmem:[%s0 + $0x1e8] sm:$0xff]
  %v73 = vld [vmem:[%s0 + $0x1f0] sm:$0xff]
  %v74 = vld [vmem:[%s0 + $0x1f8] sm:$0xff]
  %v75 = vld [vmem:[%s1] sm:$0xff]
  %v76 = vld [vmem:[%s1 + $0x8] sm:$0x7]
  %v77 = vlaneseq
  %v78 = vand.u32 %v77, 127
  %79 = vset.pattern.permute.xlu0 0
  %80 = vperm.xlu0 %79, %v11
  %v81 = vpop.permute.xlu0 %80
  %82 = vset.pattern.permute.xlu0 0
  %83 = vperm.xlu0 %82, %v12
  %v84 = vpop.permute.xlu0 %83
  %85 = vset.pattern.permute.xlu0 0
  %86 = vperm.xlu0 %85, %v13
  %v87 = vpop.permute.xlu0 %86
  %88 = vset.pattern.permute.xlu0 0
  %89 = vperm.xlu0 %88, %v14
  %v90 = vpop.permute.xlu0 %89
  %91 = vset.pattern.permute.xlu0 0
  %92 = vperm.xlu0 %91, %v15
  %v93 = vpop.permute.xlu0 %92
  %94 = vset.pattern.permute.xlu0 0
  %95 = vperm.xlu0 %94, %v16
  %v96 = vpop.permute.xlu0 %95
  %97 = vset.pattern.permute.xlu0 0
  %98 = vperm.xlu0 %97, %v17
  %v99 = vpop.permute.xlu0 %98
  %100 = vset.pattern.permute.xlu0 0
  %101 = vperm.xlu0 %100, %v18
  %v102 = vpop.permute.xlu0 %101
  %103 = vset.pattern.permute.xlu0 0
  %104 = vperm.xlu0 %103, %v19
  %v105 = vpop.permute.xlu0 %104
  %106 = vset.pattern.permute.xlu0 0
  %107 = vperm.xlu0 %106, %v20
  %v108 = vpop.permute.xlu0 %107
  %109 = vset.pattern.permute.xlu0 0
  %110 = vperm.xlu0 %109, %v21
  %v111 = vpop.permute.xlu0 %110
  %112 = vset.pattern.permute.xlu0 0
  %113 = vperm.xlu0 %112, %v22
  %v114 = vpop.permute.xlu0 %113
  %115 = vset.pattern.permute.xlu0 0
  %116 = vperm.xlu0 %115, %v23
  %v117 = vpop.permute.xlu0 %116
  %118 = vset.pattern.permute.xlu0 0
  %119 = vperm.xlu0 %118, %v24
  %v120 = vpop.permute.xlu0 %119
  %121 = vset.pattern.permute.xlu0 0
  %122 = vperm.xlu0 %121, %v25
  %v123 = vpop.permute.xlu0 %122
  %124 = vset.pattern.permute.xlu0 0
  %125 = vperm.xlu0 %124, %v26
  %v126 = vpop.permute.xlu0 %125
  %127 = vset.pattern.permute.xlu0 0
  %128 = vperm.xlu0 %127, %v27
  %v129 = vpop.permute.xlu0 %128
  %130 = vset.pattern.permute.xlu0 0
  %131 = vperm.xlu0 %130, %v28
  %v132 = vpop.permute.xlu0 %131
  %133 = vset.pattern.permute.xlu0 0
  %134 = vperm.xlu0 %133, %v29
  %v135 = vpop.permute.xlu0 %134
  %136 = vset.pattern.permute.xlu0 0
  %137 = vperm.xlu0 %136, %v30
  %v138 = vpop.permute.xlu0 %137
  %139 = vset.pattern.permute.xlu0 0
  %140 = vperm.xlu0 %139, %v31
  %v141 = vpop.permute.xlu0 %140
  %142 = vset.pattern.permute.xlu0 0
  %143 = vperm.xlu0 %142, %v32
  %v144 = vpop.permute.xlu0 %143
  %145 = vset.pattern.permute.xlu0 0
  %146 = vperm.xlu0 %145, %v33
  %v147 = vpop.permute.xlu0 %146
  %148 = vset.pattern.permute.xlu0 0
  %149 = vperm.xlu0 %148, %v34
  %v150 = vpop.permute.xlu0 %149
  %151 = vset.pattern.permute.xlu0 0
  %152 = vperm.xlu0 %151, %v35
  %v153 = vpop.permute.xlu0 %152
  %154 = vset.pattern.permute.xlu0 0
  %155 = vperm.xlu0 %154, %v36
  %v156 = vpop.permute.xlu0 %155
  %157 = vset.pattern.permute.xlu0 0
  %158 = vperm.xlu0 %157, %v37
  %v159 = vpop.permute.xlu0 %158
  %160 = vset.pattern.permute.xlu0 0
  %161 = vperm.xlu0 %160, %v38
  %v162 = vpop.permute.xlu0 %161
  %163 = vset.pattern.permute.xlu0 0
  %164 = vperm.xlu0 %163, %v39
  %v165 = vpop.permute.xlu0 %164
  %166 = vset.pattern.permute.xlu0 0
  %167 = vperm.xlu0 %166, %v40
  %v168 = vpop.permute.xlu0 %167
  %169 = vset.pattern.permute.xlu0 0
  %170 = vperm.xlu0 %169, %v41
  %v171 = vpop.permute.xlu0 %170
  %172 = vset.pattern.permute.xlu0 0
  %173 = vperm.xlu0 %172, %v42
  %v174 = vpop.permute.xlu0 %173
  %175 = vset.pattern.permute.xlu0 0
  %176 = vperm.xlu0 %175, %v43
  %v177 = vpop.permute.xlu0 %176
  %178 = vset.pattern.permute.xlu0 0
  %179 = vperm.xlu0 %178, %v44
  %v180 = vpop.permute.xlu0 %179
  %181 = vset.pattern.permute.xlu0 0
  %182 = vperm.xlu0 %181, %v45
  %v183 = vpop.permute.xlu0 %182
  %184 = vset.pattern.permute.xlu0 0
  %185 = vperm.xlu0 %184, %v46
  %v186 = vpop.permute.xlu0 %185
  %187 = vset.pattern.permute.xlu0 0
  %188 = vperm.xlu0 %187, %v47
  %v189 = vpop.permute.xlu0 %188
  %190 = vset.pattern.permute.xlu0 0
  %191 = vperm.xlu0 %190, %v48
  %v192 = vpop.permute.xlu0 %191
  %193 = vset.pattern.permute.xlu0 0
  %194 = vperm.xlu0 %193, %v49
  %v195 = vpop.permute.xlu0 %194
  %196 = vset.pattern.permute.xlu0 0
  %197 = vperm.xlu0 %196, %v50
  %v198 = vpop.permute.xlu0 %197
  %199 = vset.pattern.permute.xlu0 0
  %200 = vperm.xlu0 %199, %v51
  %v201 = vpop.permute.xlu0 %200
  %202 = vset.pattern.permute.xlu0 0
  %203 = vperm.xlu0 %202, %v52
  %v204 = vpop.permute.xlu0 %203
  %205 = vset.pattern.permute.xlu0 0
  %206 = vperm.xlu0 %205, %v53
  %v207 = vpop.permute.xlu0 %206
  %208 = vset.pattern.permute.xlu0 0
  %209 = vperm.xlu0 %208, %v54
  %v210 = vpop.permute.xlu0 %209
  %211 = vset.pattern.permute.xlu0 0
  %212 = vperm.xlu0 %211, %v55
  %v213 = vpop.permute.xlu0 %212
  %214 = vset.pattern.permute.xlu0 0
  %215 = vperm.xlu0 %214, %v56
  %v216 = vpop.permute.xlu0 %215
  %217 = vset.pattern.permute.xlu0 0
  %218 = vperm.xlu0 %217, %v57
  %v219 = vpop.permute.xlu0 %218
  %220 = vset.pattern.permute.xlu0 0
  %221 = vperm.xlu0 %220, %v58
  %v222 = vpop.permute.xlu0 %221
  %223 = vset.pattern.permute.xlu0 0
  %224 = vperm.xlu0 %223, %v59
  %v225 = vpop.permute.xlu0 %224
  %226 = vset.pattern.permute.xlu0 0
  %227 = vperm.xlu0 %226, %v60
  %v228 = vpop.permute.xlu0 %227
  %229 = vset.pattern.permute.xlu0 0
  %230 = vperm.xlu0 %229, %v61
  %v231 = vpop.permute.xlu0 %230
  %232 = vset.pattern.permute.xlu0 0
  %233 = vperm.xlu0 %232, %v62
  %v234 = vpop.permute.xlu0 %233
  %235 = vset.pattern.permute.xlu0 0
  %236 = vperm.xlu0 %235, %v63
  %v237 = vpop.permute.xlu0 %236
  %238 = vset.pattern.permute.xlu0 0
  %239 = vperm.xlu0 %238, %v64
  %v240 = vpop.permute.xlu0 %239
  %241 = vset.pattern.permute.xlu0 0
  %242 = vperm.xlu0 %241, %v65
  %v243 = vpop.permute.xlu0 %242
  %244 = vset.pattern.permute.xlu0 0
  %245 = vperm.xlu0 %244, %v66
  %v246 = vpop.permute.xlu0 %245
  %247 = vset.pattern.permute.xlu0 0
  %248 = vperm.xlu0 %247, %v67
  %v249 = vpop.permute.xlu0 %248
  %250 = vset.pattern.permute.xlu0 0
  %251 = vperm.xlu0 %250, %v68
  %v252 = vpop.permute.xlu0 %251
  %253 = vset.pattern.permute.xlu0 0
  %254 = vperm.xlu0 %253, %v69
  %v255 = vpop.permute.xlu0 %254
  %256 = vset.pattern.permute.xlu0 0
  %257 = vperm.xlu0 %256, %v70
  %v258 = vpop.permute.xlu0 %257
  %259 = vset.pattern.permute.xlu0 0
  %260 = vperm.xlu0 %259, %v71
  %v261 = vpop.permute.xlu0 %260
  %262 = vset.pattern.permute.xlu0 0
  %263 = vperm.xlu0 %262, %v72
  %v264 = vpop.permute.xlu0 %263
  %265 = vset.pattern.permute.xlu0 0
  %266 = vperm.xlu0 %265, %v73
  %v267 = vpop.permute.xlu0 %266
  %268 = vset.pattern.permute.xlu0 0
  %269 = vperm.xlu0 %268, %v74
  %v270 = vpop.permute.xlu0 %269
  %vm271 = vcmp.eq.s32.totalorder %v81, %v78
  %vm272 = vcmp.eq.s32.totalorder %v84, %v78
  %vm273 = vcmp.eq.s32.totalorder %v87, %v78
  %vm274 = vcmp.eq.s32.totalorder %v90, %v78
  %vm275 = vcmp.eq.s32.totalorder %v93, %v78
  %vm276 = vcmp.eq.s32.totalorder %v96, %v78
  %vm277 = vcmp.eq.s32.totalorder %v99, %v78
  %vm278 = vcmp.eq.s32.totalorder %v102, %v78
  %vm279 = vcmp.eq.s32.totalorder %v105, %v78
  %vm280 = vcmp.eq.s32.totalorder %v108, %v78
  %vm281 = vcmp.eq.s32.totalorder %v111, %v78
  %vm282 = vcmp.eq.s32.totalorder %v114, %v78
  %vm283 = vcmp.eq.s32.totalorder %v117, %v78
  %vm284 = vcmp.eq.s32.totalorder %v120, %v78
  %vm285 = vcmp.eq.s32.totalorder %v123, %v78
  %vm286 = vcmp.eq.s32.totalorder %v126, %v78
  %vm287 = vcmp.eq.s32.totalorder %v129, %v78
  %vm288 = vcmp.eq.s32.totalorder %v132, %v78
  %vm289 = vcmp.eq.s32.totalorder %v135, %v78
  %vm290 = vcmp.eq.s32.totalorder %v138, %v78
  %vm291 = vcmp.eq.s32.totalorder %v141, %v78
  %vm292 = vcmp.eq.s32.totalorder %v144, %v78
  %vm293 = vcmp.eq.s32.totalorder %v147, %v78
  %vm294 = vcmp.eq.s32.totalorder %v150, %v78
  %vm295 = vcmp.eq.s32.totalorder %v153, %v78
  %vm296 = vcmp.eq.s32.totalorder %v156, %v78
  %vm297 = vcmp.eq.s32.totalorder %v159, %v78
  %vm298 = vcmp.eq.s32.totalorder %v162, %v78
  %vm299 = vcmp.eq.s32.totalorder %v165, %v78
  %vm300 = vcmp.eq.s32.totalorder %v168, %v78
  %vm301 = vcmp.eq.s32.totalorder %v171, %v78
  %vm302 = vcmp.eq.s32.totalorder %v174, %v78
  %vm303 = vcmp.eq.s32.totalorder %v177, %v78
  %vm304 = vcmp.eq.s32.totalorder %v180, %v78
  %vm305 = vcmp.eq.s32.totalorder %v183, %v78
  %vm306 = vcmp.eq.s32.totalorder %v186, %v78
  %vm307 = vcmp.eq.s32.totalorder %v189, %v78
  %vm308 = vcmp.eq.s32.totalorder %v192, %v78
  %vm309 = vcmp.eq.s32.totalorder %v195, %v78
  %vm310 = vcmp.eq.s32.totalorder %v198, %v78
  %vm311 = vcmp.eq.s32.totalorder %v201, %v78
  %vm312 = vcmp.eq.s32.totalorder %v204, %v78
  %vm313 = vcmp.eq.s32.totalorder %v207, %v78
  %vm314 = vcmp.eq.s32.totalorder %v210, %v78
  %vm315 = vcmp.eq.s32.totalorder %v213, %v78
  %vm316 = vcmp.eq.s32.totalorder %v216, %v78
  %vm317 = vcmp.eq.s32.totalorder %v219, %v78
  %vm318 = vcmp.eq.s32.totalorder %v222, %v78
  %vm319 = vcmp.eq.s32.totalorder %v225, %v78
  %vm320 = vcmp.eq.s32.totalorder %v228, %v78
  %vm321 = vcmp.eq.s32.totalorder %v231, %v78
  %vm322 = vcmp.eq.s32.totalorder %v234, %v78
  %vm323 = vcmp.eq.s32.totalorder %v237, %v78
  %vm324 = vcmp.eq.s32.totalorder %v240, %v78
  %vm325 = vcmp.eq.s32.totalorder %v243, %v78
  %vm326 = vcmp.eq.s32.totalorder %v246, %v78
  %vm327 = vcmp.eq.s32.totalorder %v249, %v78
  %vm328 = vcmp.eq.s32.totalorder %v252, %v78
  %vm329 = vcmp.eq.s32.totalorder %v255, %v78
  %vm330 = vcmp.eq.s32.totalorder %v258, %v78
  %vm331 = vcmp.eq.s32.totalorder %v261, %v78
  %vm332 = vcmp.eq.s32.totalorder %v264, %v78
  %vm333 = vcmp.eq.s32.totalorder %v267, %v78
  %vm334 = vcmp.eq.s32.totalorder %v270, %v78
  %v335 = vsel %vm271, 1, 0
  %v336 = vsel %vm272, 1, 0
  %v337 = vsel %vm273, 1, 0
  %v338 = vsel %vm274, 1, 0
  %v339 = vsel %vm275, 1, 0
  %v340 = vsel %vm276, 1, 0
  %v341 = vsel %vm277, 1, 0
  %v342 = vsel %vm278, 1, 0
  %v343 = vsel %vm279, 1, 0
  %v344 = vsel %vm280, 1, 0
  %v345 = vsel %vm281, 1, 0
  %v346 = vsel %vm282, 1, 0
  %v347 = vsel %vm283, 1, 0
  %v348 = vsel %vm284, 1, 0
  %v349 = vsel %vm285, 1, 0
  %v350 = vsel %vm286, 1, 0
  %v351 = vsel %vm287, 1, 0
  %v352 = vsel %vm288, 1, 0
  %v353 = vsel %vm289, 1, 0
  %v354 = vsel %vm290, 1, 0
  %v355 = vsel %vm291, 1, 0
  %v356 = vsel %vm292, 1, 0
  %v357 = vsel %vm293, 1, 0
  %v358 = vsel %vm294, 1, 0
  %v359 = vsel %vm295, 1, 0
  %v360 = vsel %vm296, 1, 0
  %v361 = vsel %vm297, 1, 0
  %v362 = vsel %vm298, 1, 0
  %v363 = vsel %vm299, 1, 0
  %v364 = vsel %vm300, 1, 0
  %v365 = vsel %vm301, 1, 0
  %v366 = vsel %vm302, 1, 0
  %v367 = vsel %vm303, 1, 0
  %v368 = vsel %vm304, 1, 0
  %v369 = vsel %vm305, 1, 0
  %v370 = vsel %vm306, 1, 0
  %v371 = vsel %vm307, 1, 0
  %v372 = vsel %vm308, 1, 0
  %v373 = vsel %vm309, 1, 0
  %v374 = vsel %vm310, 1, 0
  %v375 = vsel %vm311, 1, 0
  %v376 = vsel %vm312, 1, 0
  %v377 = vsel %vm313, 1, 0
  %v378 = vsel %vm314, 1, 0
  %v379 = vsel %vm315, 1, 0
  %v380 = vsel %vm316, 1, 0
  %v381 = vsel %vm317, 1, 0
  %v382 = vsel %vm318, 1, 0
  %v383 = vsel %vm319, 1, 0
  %v384 = vsel %vm320, 1, 0
  %v385 = vsel %vm321, 1, 0
  %v386 = vsel %vm322, 1, 0
  %v387 = vsel %vm323, 1, 0
  %v388 = vsel %vm324, 1, 0
  %v389 = vsel %vm325, 1, 0
  %v390 = vsel %vm326, 1, 0
  %v391 = vsel %vm327, 1, 0
  %v392 = vsel %vm328, 1, 0
  %v393 = vsel %vm329, 1, 0
  %v394 = vsel %vm330, 1, 0
  %v395 = vsel %vm331, 1, 0
  %v396 = vsel %vm332, 1, 0
  %v397 = vsel %vm333, 1, 0
  %v398 = vsel %vm334, 1, 0
  %v399 = vcvt.s32.f32 %v335
  %v400 = vcvt.s32.f32 %v336
  %v401 = vcvt.s32.f32 %v337
  %v402 = vcvt.s32.f32 %v338
  %v403 = vcvt.s32.f32 %v339
  %v404 = vcvt.s32.f32 %v340
  %v405 = vcvt.s32.f32 %v341
  %v406 = vcvt.s32.f32 %v342
  %v407 = vcvt.s32.f32 %v343
  %v408 = vcvt.s32.f32 %v344
  %v409 = vcvt.s32.f32 %v345
  %v410 = vcvt.s32.f32 %v346
  %v411 = vcvt.s32.f32 %v347
  %v412 = vcvt.s32.f32 %v348
  %v413 = vcvt.s32.f32 %v349
  %v414 = vcvt.s32.f32 %v350
  %v415 = vcvt.s32.f32 %v351
  %v416 = vcvt.s32.f32 %v352
  %v417 = vcvt.s32.f32 %v353
  %v418 = vcvt.s32.f32 %v354
  %v419 = vcvt.s32.f32 %v355
  %v420 = vcvt.s32.f32 %v356
  %v421 = vcvt.s32.f32 %v357
  %v422 = vcvt.s32.f32 %v358
  %v423 = vcvt.s32.f32 %v359
  %v424 = vcvt.s32.f32 %v360
  %v425 = vcvt.s32.f32 %v361
  %v426 = vcvt.s32.f32 %v362
  %v427 = vcvt.s32.f32 %v363
  %v428 = vcvt.s32.f32 %v364
  %v429 = vcvt.s32.f32 %v365
  %v430 = vcvt.s32.f32 %v366
  %v431 = vcvt.s32.f32 %v367
  %v432 = vcvt.s32.f32 %v368
  %v433 = vcvt.s32.f32 %v369
  %v434 = vcvt.s32.f32 %v370
  %v435 = vcvt.s32.f32 %v371
  %v436 = vcvt.s32.f32 %v372
  %v437 = vcvt.s32.f32 %v373
  %v438 = vcvt.s32.f32 %v374
  %v439 = vcvt.s32.f32 %v375
  %v440 = vcvt.s32.f32 %v376
  %v441 = vcvt.s32.f32 %v377
  %v442 = vcvt.s32.f32 %v378
  %v443 = vcvt.s32.f32 %v379
  %v444 = vcvt.s32.f32 %v380
  %v445 = vcvt.s32.f32 %v381
  %v446 = vcvt.s32.f32 %v382
  %v447 = vcvt.s32.f32 %v383
  %v448 = vcvt.s32.f32 %v384
  %v449 = vcvt.s32.f32 %v385
  %v450 = vcvt.s32.f32 %v386
  %v451 = vcvt.s32.f32 %v387
  %v452 = vcvt.s32.f32 %v388
  %v453 = vcvt.s32.f32 %v389
  %v454 = vcvt.s32.f32 %v390
  %v455 = vcvt.s32.f32 %v391
  %v456 = vcvt.s32.f32 %v392
  %v457 = vcvt.s32.f32 %v393
  %v458 = vcvt.s32.f32 %v394
  %v459 = vcvt.s32.f32 %v395
  %v460 = vcvt.s32.f32 %v396
  %v461 = vcvt.s32.f32 %v397
  %v462 = vcvt.s32.f32 %v398
  %vm463 = vcmask 89088
  %v465 = vsel %vm463, %v399, 0
  %v468 = vsel %vm463, %v400, 0
  %v471 = vsel %vm463, %v401, 0
  %v474 = vsel %vm463, %v402, 0
  %v477 = vsel %vm463, %v403, 0
  %v480 = vsel %vm463, %v404, 0
  %v483 = vsel %vm463, %v405, 0
  %v486 = vsel %vm463, %v406, 0
  %v489 = vsel %vm463, %v407, 0
  %v492 = vsel %vm463, %v408, 0
  %v495 = vsel %vm463, %v409, 0
  %v498 = vsel %vm463, %v410, 0
  %v501 = vsel %vm463, %v411, 0
  %v504 = vsel %vm463, %v412, 0
  %v507 = vsel %vm463, %v413, 0
  %v510 = vsel %vm463, %v414, 0
  %v513 = vsel %vm463, %v415, 0
  %v516 = vsel %vm463, %v416, 0
  %v519 = vsel %vm463, %v417, 0
  %v522 = vsel %vm463, %v418, 0
  %v525 = vsel %vm463, %v419, 0
  %v528 = vsel %vm463, %v420, 0
  %v531 = vsel %vm463, %v421, 0
  %v534 = vsel %vm463, %v422, 0
  %v537 = vsel %vm463, %v423, 0
  %v540 = vsel %vm463, %v424, 0
  %v543 = vsel %vm463, %v425, 0
  %v546 = vsel %vm463, %v426, 0
  %v549 = vsel %vm463, %v427, 0
  %v552 = vsel %vm463, %v428, 0
  %v555 = vsel %vm463, %v429, 0
  %v558 = vsel %vm463, %v430, 0
  %v561 = vsel %vm463, %v431, 0
  %v564 = vsel %vm463, %v432, 0
  %v567 = vsel %vm463, %v433, 0
  %v570 = vsel %vm463, %v434, 0
  %v573 = vsel %vm463, %v435, 0
  %v576 = vsel %vm463, %v436, 0
  %v579 = vsel %vm463, %v437, 0
  %v582 = vsel %vm463, %v438, 0
  %v585 = vsel %vm463, %v439, 0
  %v588 = vsel %vm463, %v440, 0
  %v591 = vsel %vm463, %v441, 0
  %v594 = vsel %vm463, %v442, 0
  %v597 = vsel %vm463, %v443, 0
  %v600 = vsel %vm463, %v444, 0
  %v603 = vsel %vm463, %v445, 0
  %v606 = vsel %vm463, %v446, 0
  %v609 = vsel %vm463, %v447, 0
  %v612 = vsel %vm463, %v448, 0
  %v615 = vsel %vm463, %v449, 0
  %v618 = vsel %vm463, %v450, 0
  %v621 = vsel %vm463, %v451, 0
  %v624 = vsel %vm463, %v452, 0
  %v627 = vsel %vm463, %v453, 0
  %v630 = vsel %vm463, %v454, 0
  %v633 = vsel %vm463, %v455, 0
  %v636 = vsel %vm463, %v456, 0
  %v639 = vsel %vm463, %v457, 0
  %v642 = vsel %vm463, %v458, 0
  %v645 = vsel %vm463, %v459, 0
  %v648 = vsel %vm463, %v460, 0
  %v651 = vsel %vm463, %v461, 0
  %v654 = vsel %vm463, %v462, 0
  %vm656 = vcmask 1042432
  %v658 = vsel %vm656, %v76, 0
  %660 = vmatprep.subr.mxu0 0.0
  %661 = vmatpush1.msra.mxu0 %v75
  %662 = vmatprep.subr.mxu0 0.0
  %663 = vmatpush1.msra.mxu0 %v658
  %664 = vmatprep.subr.mxu0 0.0
  %665 = vmatpush1.msra.mxu0 0.0
  %666 = vmatprep.subr.mxu0 0.0
  %667 = vmatpush1.msra.mxu0 0.0
  %668 = vmatprep.subr.mxu0 0.0
  %669 = vmatpush1.msra.mxu0 0.0
  %670 = vmatprep.subr.mxu0 0.0
  %671 = vmatpush1.msra.mxu0 0.0
  %672 = vmatprep.subr.mxu0 0.0
  %673 = vmatpush1.msra.mxu0 0.0
  %674 = vmatprep.subr.mxu0 0.0
  %675 = vmatpush1.msra.mxu0 0.0
  %676 = vmatprep.subr.mxu0 0.0
  %677 = vmatpush1.msra.mxu0 0.0
  %678 = vmatprep.subr.mxu0 0.0
  %679 = vmatpush1.msra.mxu0 0.0
  %680 = vmatprep.subr.mxu0 0.0
  %681 = vmatpush1.msra.mxu0 0.0
  %682 = vmatprep.subr.mxu0 0.0
  %683 = vmatpush1.msra.mxu0 0.0
  %684 = vmatprep.subr.mxu0 0.0
  %685 = vmatpush1.msra.mxu0 0.0
  %686 = vmatprep.subr.mxu0 0.0
  %687 = vmatpush1.msra.mxu0 0.0
  %688 = vmatprep.subr.mxu0 0.0
  %689 = vmatpush1.msra.mxu0 0.0
  %690 = vmatprep.subr.mxu0 0.0
  %691 = vmatpush1.msra.mxu0 0.0
  %692 = vmatprep.subr.mxu0 0.0
  %693 = vmatpush1.msra.mxu0 0.0
  %694 = vmatprep.subr.mxu0 0.0
  %695 = vmatpush1.msra.mxu0 0.0
  %696 = vmatprep.subr.mxu0 0.0
  %697 = vmatpush1.msra.mxu0 0.0
  %698 = vmatprep.subr.mxu0 0.0
  %699 = vmatpush1.msra.mxu0 0.0
  %700 = vmatprep.subr.mxu0 0.0
  %701 = vmatpush1.msra.mxu0 0.0
  %702 = vmatprep.subr.mxu0 0.0
  %703 = vmatpush1.msra.mxu0 0.0
  %704 = vmatprep.subr.mxu0 0.0
  %705 = vmatpush1.msra.mxu0 0.0
  %706 = vmatprep.subr.mxu0 0.0
  %707 = vmatpush1.msra.mxu0 0.0
  %708 = vmatprep.subr.mxu0 0.0
  %709 = vmatpush1.msra.mxu0 0.0
  %710 = vmatprep.subr.mxu0 0.0
  %711 = vmatpush1.msra.mxu0 0.0
  %712 = vmatprep.subr.mxu0 0.0
  %713 = vmatpush1.msra.mxu0 0.0
  %714 = vmatprep.subr.mxu0 0.0
  %715 = vmatpush1.msra.mxu0 0.0
  %716 = vmatprep.subr.mxu0 0.0
  %717 = vmatpush1.msra.mxu0 0.0
  %718 = vmatprep.subr.mxu0 0.0
  %719 = vmatpush1.msra.mxu0 0.0
  %720 = vmatprep.subr.mxu0 0.0
  %721 = vmatpush1.msra.mxu0 0.0
  %722 = vmatprep.subr.mxu0 0.0
  %723 = vmatpush1.msra.mxu0 0.0
  %724 = vmatprep.mubr.f32.mxu0 0.0
  %725 = vmatmul.mubr.f32.gmra.mrb[0].mxu0 %v465
  %v726 = vpop.f32.mrb[0].mxu0
  %v727 = vadd.f32 0.0, %v726
  %v728 = vpop.f32.mrb[0].mxu0
  %729 = vmatprep.mubr.f32.mxu0 0.0
  %730 = vmatmul.mubr.f32.gmra.mrb[0].mxu0 %v468
  %v731 = vpop.f32.mrb[0].mxu0
  %v732 = vadd.f32 0.0, %v731
  %v733 = vpop.f32.mrb[0].mxu0
  %734 = vmatprep.mubr.f32.mxu0 0.0
  %735 = vmatmul.mubr.f32.gmra.mrb[0].mxu0 %v471
  %v736 = vpop.f32.mrb[0].mxu0
  %v737 = vadd.f32 0.0, %v736
  %v738 = vpop.f32.mrb[0].mxu0
  %739 = vmatprep.mubr.f32.mxu0 0.0
  %740 = vmatmul.mubr.f32.gmra.mrb[0].mxu0 %v474
  %v741 = vpop.f32.mrb[0].mxu0
  %v742 = vadd.f32 0.0, %v741
  %v743 = vpop.f32.mrb[0].mxu0
  %744 = vmatprep.mubr.f32.mxu0 0.0
  %745 = vmatmul.mubr.f32.gmra.mrb[0].mxu0 %v477
  %v746 = vpop.f32.mrb[0].mxu0
  %v747 = vadd.f32 0.0, %v746
  %v748 = vpop.f32.mrb[0].mxu0
  %749 = vmatprep.mubr.f32.mxu0 0.0
  %750 = vmatmul.mubr.f32.gmra.mrb[0].mxu0 %v480
  %v751 = vpop.f32.mrb[0].mxu0
  %v752 = vadd.f32 0.0, %v751
  %v753 = vpop.f32.mrb[0].mxu0
  %754 = vmatprep.mubr.f32.mxu0 0.0
  %755 = vmatmul.mubr.f32.gmra.mrb[0].mxu0 %v483
  %v756 = vpop.f32.mrb[0].mxu0
  %v757 = vadd.f32 0.0, %v756
  %v758 = vpop.f32.mrb[0].mxu0
  %759 = vmatprep.mubr.f32.mxu0 0.0
  %760 = vmatmul.mubr.f32.gmra.mrb[0].mxu0 %v486
  %v761 = vpop.f32.mrb[0].mxu0
  %v762 = vadd.f32 0.0, %v761
  %v763 = vpop.f32.mrb[0].mxu0
  %764 = vmatprep.mubr.f32.mxu0 0.0
  %765 = vmatmul.mubr.f32.gmra.mrb[0].mxu0 %v489
  %v766 = vpop.f32.mrb[0].mxu0
  %v767 = vadd.f32 0.0, %v766
  %v768 = vpop.f32.mrb[0].mxu0
  %769 = vmatprep.mubr.f32.mxu0 0.0
  %770 = vmatmul.mubr.f32.gmra.mrb[0].mxu0 %v492
  %v771 = vpop.f32.mrb[0].mxu0
  %v772 = vadd.f32 0.0, %v771
  %v773 = vpop.f32.mrb[0].mxu0
  %774 = vmatprep.mubr.f32.mxu0 0.0
  %775 = vmatmul.mubr.f32.gmra.mrb[0].mxu0 %v495
  %v776 = vpop.f32.mrb[0].mxu0
  %v777 = vadd.f32 0.0, %v776
  %v778 = vpop.f32.mrb[0].mxu0
  %779 = vmatprep.mubr.f32.mxu0 0.0
  %780 = vmatmul.mubr.f32.gmra.mrb[0].mxu0 %v498
  %v781 = vpop.f32.mrb[0].mxu0
  %v782 = vadd.f32 0.0, %v781
  %v783 = vpop.f32.mrb[0].mxu0
  %784 = vmatprep.mubr.f32.mxu0 0.0
  %785 = vmatmul.mubr.f32.gmra.mrb[0].mxu0 %v501
  %v786 = vpop.f32.mrb[0].mxu0
  %v787 = vadd.f32 0.0, %v786
  %v788 = vpop.f32.mrb[0].mxu0
  %789 = vmatprep.mubr.f32.mxu0 0.0
  %790 = vmatmul.mubr.f32.gmra.mrb[0].mxu0 %v504
  %v791 = vpop.f32.mrb[0].mxu0
  %v792 = vadd.f32 0.0, %v791
  %v793 = vpop.f32.mrb[0].mxu0
  %794 = vmatprep.mubr.f32.mxu0 0.0
  %795 = vmatmul.mubr.f32.gmra.mrb[0].mxu0 %v507
  %v796 = vpop.f32.mrb[0].mxu0
  %v797 = vadd.f32 0.0, %v796
  %v798 = vpop.f32.mrb[0].mxu0
  %799 = vmatprep.mubr.f32.mxu0 0.0
  %800 = vmatmul.mubr.f32.gmra.mrb[0].mxu0 %v510
  %v801 = vpop.f32.mrb[0].mxu0
  %v802 = vadd.f32 0.0, %v801
  %v803 = vpop.f32.mrb[0].mxu0
  %804 = vmatprep.mubr.f32.mxu0 0.0
  %805 = vmatmul.mubr.f32.gmra.mrb[0].mxu0 %v513
  %v806 = vpop.f32.mrb[0].mxu0
  %v807 = vadd.f32 0.0, %v806
  %v808 = vpop.f32.mrb[0].mxu0
  %809 = vmatprep.mubr.f32.mxu0 0.0
  %810 = vmatmul.mubr.f32.gmra.mrb[0].mxu0 %v516
  %v811 = vpop.f32.mrb[0].mxu0
  %v812 = vadd.f32 0.0, %v811
  %v813 = vpop.f32.mrb[0].mxu0
  %814 = vmatprep.mubr.f32.mxu0 0.0
  %815 = vmatmul.mubr.f32.gmra.mrb[0].mxu0 %v519
  %v816 = vpop.f32.mrb[0].mxu0
  %v817 = vadd.f32 0.0, %v816
  %v818 = vpop.f32.mrb[0].mxu0
  %819 = vmatprep.mubr.f32.mxu0 0.0
  %820 = vmatmul.mubr.f32.gmra.mrb[0].mxu0 %v522
  %v821 = vpop.f32.mrb[0].mxu0
  %v822 = vadd.f32 0.0, %v821
  %v823 = vpop.f32.mrb[0].mxu0
  %824 = vmatprep.mubr.f32.mxu0 0.0
  %825 = vmatmul.mubr.f32.gmra.mrb[0].mxu0 %v525
  %v826 = vpop.f32.mrb[0].mxu0
  %v827 = vadd.f32 0.0, %v826
  %v828 = vpop.f32.mrb[0].mxu0
  %829 = vmatprep.mubr.f32.mxu0 0.0
  %830 = vmatmul.mubr.f32.gmra.mrb[0].mxu0 %v528
  %v831 = vpop.f32.mrb[0].mxu0
  %v832 = vadd.f32 0.0, %v831
  %v833 = vpop.f32.mrb[0].mxu0
  %834 = vmatprep.mubr.f32.mxu0 0.0
  %835 = vmatmul.mubr.f32.gmra.mrb[0].mxu0 %v531
  %v836 = vpop.f32.mrb[0].mxu0
  %v837 = vadd.f32 0.0, %v836
  %v838 = vpop.f32.mrb[0].mxu0
  %839 = vmatprep.mubr.f32.mxu0 0.0
  %840 = vmatmul.mubr.f32.gmra.mrb[0].mxu0 %v534
  %v841 = vpop.f32.mrb[0].mxu0
  %v842 = vadd.f32 0.0, %v841
  %v843 = vpop.f32.mrb[0].mxu0
  %844 = vmatprep.mubr.f32.mxu0 0.0
  %845 = vmatmul.mubr.f32.gmra.mrb[0].mxu0 %v537
  %v846 = vpop.f32.mrb[0].mxu0
  %v847 = vadd.f32 0.0, %v846
  %v848 = vpop.f32.mrb[0].mxu0
  %849 = vmatprep.mubr.f32.mxu0 0.0
  %850 = vmatmul.mubr.f32.gmra.mrb[0].mxu0 %v540
  %v851 = vpop.f32.mrb[0].mxu0
  %v852 = vadd.f32 0.0, %v851
  %v853 = vpop.f32.mrb[0].mxu0
  %854 = vmatprep.mubr.f32.mxu0 0.0
  %855 = vmatmul.mubr.f32.gmra.mrb[0].mxu0 %v543
  %v856 = vpop.f32.mrb[0].mxu0
  %v857 = vadd.f32 0.0, %v856
  %v858 = vpop.f32.mrb[0].mxu0
  %859 = vmatprep.mubr.f32.mxu0 0.0
  %860 = vmatmul.mubr.f32.gmra.mrb[0].mxu0 %v546
  %v861 = vpop.f32.mrb[0].mxu0
  %v862 = vadd.f32 0.0, %v861
  %v863 = vpop.f32.mrb[0].mxu0
  %864 = vmatprep.mubr.f32.mxu0 0.0
  %865 = vmatmul.mubr.f32.gmra.mrb[0].mxu0 %v549
  %v866 = vpop.f32.mrb[0].mxu0
  %v867 = vadd.f32 0.0, %v866
  %v868 = vpop.f32.mrb[0].mxu0
  %869 = vmatprep.mubr.f32.mxu0 0.0
  %870 = vmatmul.mubr.f32.gmra.mrb[0].mxu0 %v552
  %v871 = vpop.f32.mrb[0].mxu0
  %v872 = vadd.f32 0.0, %v871
  %v873 = vpop.f32.mrb[0].mxu0
  %874 = vmatprep.mubr.f32.mxu0 0.0
  %875 = vmatmul.mubr.f32.gmra.mrb[0].mxu0 %v555
  %v876 = vpop.f32.mrb[0].mxu0
  %v877 = vadd.f32 0.0, %v876
  %v878 = vpop.f32.mrb[0].mxu0
  %879 = vmatprep.mubr.f32.mxu0 0.0
  %880 = vmatmul.mubr.f32.gmra.mrb[0].mxu0 %v558
  %v881 = vpop.f32.mrb[0].mxu0
  %v882 = vadd.f32 0.0, %v881
  %v883 = vpop.f32.mrb[0].mxu0
  %884 = vmatprep.mubr.f32.mxu0 0.0
  %885 = vmatmul.mubr.f32.gmra.mrb[0].mxu0 %v561
  %v886 = vpop.f32.mrb[0].mxu0
  %v887 = vadd.f32 0.0, %v886
  %v888 = vpop.f32.mrb[0].mxu0
  %889 = vmatprep.mubr.f32.mxu0 0.0
  %890 = vmatmul.mubr.f32.gmra.mrb[0].mxu0 %v564
  %v891 = vpop.f32.mrb[0].mxu0
  %v892 = vadd.f32 0.0, %v891
  %v893 = vpop.f32.mrb[0].mxu0
  %894 = vmatprep.mubr.f32.mxu0 0.0
  %895 = vmatmul.mubr.f32.gmra.mrb[0].mxu0 %v567
  %v896 = vpop.f32.mrb[0].mxu0
  %v897 = vadd.f32 0.0, %v896
  %v898 = vpop.f32.mrb[0].mxu0
  %899 = vmatprep.mubr.f32.mxu0 0.0
  %900 = vmatmul.mubr.f32.gmra.mrb[0].mxu0 %v570
  %v901 = vpop.f32.mrb[0].mxu0
  %v902 = vadd.f32 0.0, %v901
  %v903 = vpop.f32.mrb[0].mxu0
  %904 = vmatprep.mubr.f32.mxu0 0.0
  %905 = vmatmul.mubr.f32.gmra.mrb[0].mxu0 %v573
  %v906 = vpop.f32.mrb[0].mxu0
  %v907 = vadd.f32 0.0, %v906
  %v908 = vpop.f32.mrb[0].mxu0
  %909 = vmatprep.mubr.f32.mxu0 0.0
  %910 = vmatmul.mubr.f32.gmra.mrb[0].mxu0 %v576
  %v911 = vpop.f32.mrb[0].mxu0
  %v912 = vadd.f32 0.0, %v911
  %v913 = vpop.f32.mrb[0].mxu0
  %914 = vmatprep.mubr.f32.mxu0 0.0
  %915 = vmatmul.mubr.f32.gmra.mrb[0].mxu0 %v579
  %v916 = vpop.f32.mrb[0].mxu0
  %v917 = vadd.f32 0.0, %v916
  %v918 = vpop.f32.mrb[0].mxu0
  %919 = vmatprep.mubr.f32.mxu0 0.0
  %920 = vmatmul.mubr.f32.gmra.mrb[0].mxu0 %v582
  %v921 = vpop.f32.mrb[0].mxu0
  %v922 = vadd.f32 0.0, %v921
  %v923 = vpop.f32.mrb[0].mxu0
  %924 = vmatprep.mubr.f32.mxu0 0.0
  %925 = vmatmul.mubr.f32.gmra.mrb[0].mxu0 %v585
  %v926 = vpop.f32.mrb[0].mxu0
  %v927 = vadd.f32 0.0, %v926
  %v928 = vpop.f32.mrb[0].mxu0
  %929 = vmatprep.mubr.f32.mxu0 0.0
  %930 = vmatmul.mubr.f32.gmra.mrb[0].mxu0 %v588
  %v931 = vpop.f32.mrb[0].mxu0
  %v932 = vadd.f32 0.0, %v931
  %v933 = vpop.f32.mrb[0].mxu0
  %934 = vmatprep.mubr.f32.mxu0 0.0
  %935 = vmatmul.mubr.f32.gmra.mrb[0].mxu0 %v591
  %v936 = vpop.f32.mrb[0].mxu0
  %v937 = vadd.f32 0.0, %v936
  %v938 = vpop.f32.mrb[0].mxu0
  %939 = vmatprep.mubr.f32.mxu0 0.0
  %940 = vmatmul.mubr.f32.gmra.mrb[0].mxu0 %v594
  %v941 = vpop.f32.mrb[0].mxu0
  %v942 = vadd.f32 0.0, %v941
  %v943 = vpop.f32.mrb[0].mxu0
  %944 = vmatprep.mubr.f32.mxu0 0.0
  %945 = vmatmul.mubr.f32.gmra.mrb[0].mxu0 %v597
  %v946 = vpop.f32.mrb[0].mxu0
  %v947 = vadd.f32 0.0, %v946
  %v948 = vpop.f32.mrb[0].mxu0
  %949 = vmatprep.mubr.f32.mxu0 0.0
  %950 = vmatmul.mubr.f32.gmra.mrb[0].mxu0 %v600
  %v951 = vpop.f32.mrb[0].mxu0
  %v952 = vadd.f32 0.0, %v951
  %v953 = vpop.f32.mrb[0].mxu0
  %954 = vmatprep.mubr.f32.mxu0 0.0
  %955 = vmatmul.mubr.f32.gmra.mrb[0].mxu0 %v603
  %v956 = vpop.f32.mrb[0].mxu0
  %v957 = vadd.f32 0.0, %v956
  %v958 = vpop.f32.mrb[0].mxu0
  %959 = vmatprep.mubr.f32.mxu0 0.0
  %960 = vmatmul.mubr.f32.gmra.mrb[0].mxu0 %v606
  %v961 = vpop.f32.mrb[0].mxu0
  %v962 = vadd.f32 0.0, %v961
  %v963 = vpop.f32.mrb[0].mxu0
  %964 = vmatprep.mubr.f32.mxu0 0.0
  %965 = vmatmul.mubr.f32.gmra.mrb[0].mxu0 %v609
  %v966 = vpop.f32.mrb[0].mxu0
  %v967 = vadd.f32 0.0, %v966
  %v968 = vpop.f32.mrb[0].mxu0
  %969 = vmatprep.mubr.f32.mxu0 0.0
  %970 = vmatmul.mubr.f32.gmra.mrb[0].mxu0 %v612
  %v971 = vpop.f32.mrb[0].mxu0
  %v972 = vadd.f32 0.0, %v971
  %v973 = vpop.f32.mrb[0].mxu0
  %974 = vmatprep.mubr.f32.mxu0 0.0
  %975 = vmatmul.mubr.f32.gmra.mrb[0].mxu0 %v615
  %v976 = vpop.f32.mrb[0].mxu0
  %v977 = vadd.f32 0.0, %v976
  %v978 = vpop.f32.mrb[0].mxu0
  %979 = vmatprep.mubr.f32.mxu0 0.0
  %980 = vmatmul.mubr.f32.gmra.mrb[0].mxu0 %v618
  %v981 = vpop.f32.mrb[0].mxu0
  %v982 = vadd.f32 0.0, %v981
  %v983 = vpop.f32.mrb[0].mxu0
  %984 = vmatprep.mubr.f32.mxu0 0.0
  %985 = vmatmul.mubr.f32.gmra.mrb[0].mxu0 %v621
  %v986 = vpop.f32.mrb[0].mxu0
  %v987 = vadd.f32 0.0, %v986
  %v988 = vpop.f32.mrb[0].mxu0
  %989 = vmatprep.mubr.f32.mxu0 0.0
  %990 = vmatmul.mubr.f32.gmra.mrb[0].mxu0 %v624
  %v991 = vpop.f32.mrb[0].mxu0
  %v992 = vadd.f32 0.0, %v991
  %v993 = vpop.f32.mrb[0].mxu0
  %994 = vmatprep.mubr.f32.mxu0 0.0
  %995 = vmatmul.mubr.f32.gmra.mrb[0].mxu0 %v627
  %v996 = vpop.f32.mrb[0].mxu0
  %v997 = vadd.f32 0.0, %v996
  %v998 = vpop.f32.mrb[0].mxu0
  %999 = vmatprep.mubr.f32.mxu0 0.0
  %1000 = vmatmul.mubr.f32.gmra.mrb[0].mxu0 %v630
  %v1001 = vpop.f32.mrb[0].mxu0
  %v1002 = vadd.f32 0.0, %v1001
  %v1003 = vpop.f32.mrb[0].mxu0
  %1004 = vmatprep.mubr.f32.mxu0 0.0
  %1005 = vmatmul.mubr.f32.gmra.mrb[0].mxu0 %v633
  %v1006 = vpop.f32.mrb[0].mxu0
  %v1007 = vadd.f32 0.0, %v1006
  %v1008 = vpop.f32.mrb[0].mxu0
  %1009 = vmatprep.mubr.f32.mxu0 0.0
  %1010 = vmatmul.mubr.f32.gmra.mrb[0].mxu0 %v636
  %v1011 = vpop.f32.mrb[0].mxu0
  %v1012 = vadd.f32 0.0, %v1011
  %v1013 = vpop.f32.mrb[0].mxu0
  %1014 = vmatprep.mubr.f32.mxu0 0.0
  %1015 = vmatmul.mubr.f32.gmra.mrb[0].mxu0 %v639
  %v1016 = vpop.f32.mrb[0].mxu0
  %v1017 = vadd.f32 0.0, %v1016
  %v1018 = vpop.f32.mrb[0].mxu0
  %1019 = vmatprep.mubr.f32.mxu0 0.0
  %1020 = vmatmul.mubr.f32.gmra.mrb[0].mxu0 %v642
  %v1021 = vpop.f32.mrb[0].mxu0
  %v1022 = vadd.f32 0.0, %v1021
  %v1023 = vpop.f32.mrb[0].mxu0
  %1024 = vmatprep.mubr.f32.mxu0 0.0
  %1025 = vmatmul.mubr.f32.gmra.mrb[0].mxu0 %v645
  %v1026 = vpop.f32.mrb[0].mxu0
  %v1027 = vadd.f32 0.0, %v1026
  %v1028 = vpop.f32.mrb[0].mxu0
  %1029 = vmatprep.mubr.f32.mxu0 0.0
  %1030 = vmatmul.mubr.f32.gmra.mrb[0].mxu0 %v648
  %v1031 = vpop.f32.mrb[0].mxu0
  %v1032 = vadd.f32 0.0, %v1031
  %v1033 = vpop.f32.mrb[0].mxu0
  %1034 = vmatprep.mubr.f32.mxu0 0.0
  %1035 = vmatmul.mubr.f32.gmra.mrb[0].mxu0 %v651
  %v1036 = vpop.f32.mrb[0].mxu0
  %v1037 = vadd.f32 0.0, %v1036
  %v1038 = vpop.f32.mrb[0].mxu0
  %1039 = vmatprep.mubr.f32.mxu0 0.0
  %1040 = vmatmul.mubr.f32.gmra.mrb[0].mxu0 %v654
  %v1041 = vpop.f32.mrb[0].mxu0
  %v1042 = vadd.f32 0.0, %v1041
  %v1043 = vpop.f32.mrb[0].mxu0
  %1044 = vdwg.mxu0
  %vm1045 = vcmask 261120
  %1046 = vst.msk [vmem:[%s2] sm:$0xff] %vm1045, %v727
  %1047 = vst.msk [vmem:[%s2 + $0x8] sm:$0xff] %vm1045, %v732
  %1048 = vst.msk [vmem:[%s2 + $0x10] sm:$0xff] %vm1045, %v737
  %1049 = vst.msk [vmem:[%s2 + $0x18] sm:$0xff] %vm1045, %v742
  %1050 = vst.msk [vmem:[%s2 + $0x20] sm:$0xff] %vm1045, %v747
  %1051 = vst.msk [vmem:[%s2 + $0x28] sm:$0xff] %vm1045, %v752
  %1052 = vst.msk [vmem:[%s2 + $0x30] sm:$0xff] %vm1045, %v757
  %1053 = vst.msk [vmem:[%s2 + $0x38] sm:$0xff] %vm1045, %v762
  %1054 = vst.msk [vmem:[%s2 + $0x40] sm:$0xff] %vm1045, %v767
  %1055 = vst.msk [vmem:[%s2 + $0x48] sm:$0xff] %vm1045, %v772
  %1056 = vst.msk [vmem:[%s2 + $0x50] sm:$0xff] %vm1045, %v777
  %1057 = vst.msk [vmem:[%s2 + $0x58] sm:$0xff] %vm1045, %v782
  %1058 = vst.msk [vmem:[%s2 + $0x60] sm:$0xff] %vm1045, %v787
  %1059 = vst.msk [vmem:[%s2 + $0x68] sm:$0xff] %vm1045, %v792
  %1060 = vst.msk [vmem:[%s2 + $0x70] sm:$0xff] %vm1045, %v797
  %1061 = vst.msk [vmem:[%s2 + $0x78] sm:$0xff] %vm1045, %v802
  %1062 = vst.msk [vmem:[%s2 + $0x80] sm:$0xff] %vm1045, %v807
  %1063 = vst.msk [vmem:[%s2 + $0x88] sm:$0xff] %vm1045, %v812
  %1064 = vst.msk [vmem:[%s2 + $0x90] sm:$0xff] %vm1045, %v817
  %1065 = vst.msk [vmem:[%s2 + $0x98] sm:$0xff] %vm1045, %v822
  %1066 = vst.msk [vmem:[%s2 + $0xa0] sm:$0xff] %vm1045, %v827
  %1067 = vst.msk [vmem:[%s2 + $0xa8] sm:$0xff] %vm1045, %v832
  %1068 = vst.msk [vmem:[%s2 + $0xb0] sm:$0xff] %vm1045, %v837
  %1069 = vst.msk [vmem:[%s2 + $0xb8] sm:$0xff] %vm1045, %v842
  %1070 = vst.msk [vmem:[%s2 + $0xc0] sm:$0xff] %vm1045, %v847
  %1071 = vst.msk [vmem:[%s2 + $0xc8] sm:$0xff] %vm1045, %v852
  %1072 = vst.msk [vmem:[%s2 + $0xd0] sm:$0xff] %vm1045, %v857
  %1073 = vst.msk [vmem:[%s2 + $0xd8] sm:$0xff] %vm1045, %v862
  %1074 = vst.msk [vmem:[%s2 + $0xe0] sm:$0xff] %vm1045, %v867
  %1075 = vst.msk [vmem:[%s2 + $0xe8] sm:$0xff] %vm1045, %v872
  %1076 = vst.msk [vmem:[%s2 + $0xf0] sm:$0xff] %vm1045, %v877
  %1077 = vst.msk [vmem:[%s2 + $0xf8] sm:$0xff] %vm1045, %v882
  %1078 = vst.msk [vmem:[%s2 + $0x100] sm:$0xff] %vm1045, %v887
  %1079 = vst.msk [vmem:[%s2 + $0x108] sm:$0xff] %vm1045, %v892
  %1080 = vst.msk [vmem:[%s2 + $0x110] sm:$0xff] %vm1045, %v897
  %1081 = vst.msk [vmem:[%s2 + $0x118] sm:$0xff] %vm1045, %v902
  %1082 = vst.msk [vmem:[%s2 + $0x120] sm:$0xff] %vm1045, %v907
  %1083 = vst.msk [vmem:[%s2 + $0x128] sm:$0xff] %vm1045, %v912
  %1084 = vst.msk [vmem:[%s2 + $0x130] sm:$0xff] %vm1045, %v917
  %1085 = vst.msk [vmem:[%s2 + $0x138] sm:$0xff] %vm1045, %v922
  %1086 = vst.msk [vmem:[%s2 + $0x140] sm:$0xff] %vm1045, %v927
  %1087 = vst.msk [vmem:[%s2 + $0x148] sm:$0xff] %vm1045, %v932
  %1088 = vst.msk [vmem:[%s2 + $0x150] sm:$0xff] %vm1045, %v937
  %1089 = vst.msk [vmem:[%s2 + $0x158] sm:$0xff] %vm1045, %v942
  %1090 = vst.msk [vmem:[%s2 + $0x160] sm:$0xff] %vm1045, %v947
  %1091 = vst.msk [vmem:[%s2 + $0x168] sm:$0xff] %vm1045, %v952
  %1092 = vst.msk [vmem:[%s2 + $0x170] sm:$0xff] %vm1045, %v957
  %1093 = vst.msk [vmem:[%s2 + $0x178] sm:$0xff] %vm1045, %v962
  %1094 = vst.msk [vmem:[%s2 + $0x180] sm:$0xff] %vm1045, %v967
  %1095 = vst.msk [vmem:[%s2 + $0x188] sm:$0xff] %vm1045, %v972
  %1096 = vst.msk [vmem:[%s2 + $0x190] sm:$0xff] %vm1045, %v977
  %1097 = vst.msk [vmem:[%s2 + $0x198] sm:$0xff] %vm1045, %v982
  %1098 = vst.msk [vmem:[%s2 + $0x1a0] sm:$0xff] %vm1045, %v987
  %1099 = vst.msk [vmem:[%s2 + $0x1a8] sm:$0xff] %vm1045, %v992
  %1100 = vst.msk [vmem:[%s2 + $0x1b0] sm:$0xff] %vm1045, %v997
  %1101 = vst.msk [vmem:[%s2 + $0x1b8] sm:$0xff] %vm1045, %v1002
  %1102 = vst.msk [vmem:[%s2 + $0x1c0] sm:$0xff] %vm1045, %v1007
  %1103 = vst.msk [vmem:[%s2 + $0x1c8] sm:$0xff] %vm1045, %v1012
  %1104 = vst.msk [vmem:[%s2 + $0x1d0] sm:$0xff] %vm1045, %v1017
  %1105 = vst.msk [vmem:[%s2 + $0x1d8] sm:$0xff] %vm1045, %v1022
  %1106 = vst.msk [vmem:[%s2 + $0x1e0] sm:$0xff] %vm1045, %v1027
  %1107 = vst.msk [vmem:[%s2 + $0x1e8] sm:$0xff] %vm1045, %v1032
  %1108 = vst.msk [vmem:[%s2 + $0x1f0] sm:$0xff] %vm1045, %v1037
  %1109 = vst.msk [vmem:[%s2 + $0x1f8] sm:$0xff] %vm1045, %v1042
  // Predicated region
  $region10: #{tpu_custom_call.1} parent=0 // pred_check
    _
  $region11: #{tpu_custom_call.1} parent=0 // pred_check_branch
    %1111 = sbr.rel (0) target = $region13
  $region12: #{tpu_custom_call.1} parent=0 // pred_region
    _
  $region13: #{tpu_custom_call.1} parent=0 // pred_fallthru
    _
  // Predicated region
  $region14: #{tpu_custom_call.1} parent=0 // pred_check
    _
  $region15: #{tpu_custom_call.1} parent=0 // pred_check_branch
    %1113 = sbr.rel (0) target = $region17
  $region16: #{tpu_custom_call.1} parent=0 // pred_region
    _
  $region17: #{tpu_custom_call.1} parent=0 // pred_fallthru
    _

</llo_original>
